<compile_context>
chip_gen: v7x
topology: tpu7x:2x2x1
jax: 0.10.0
libtpu: 0.0.40
codegen_flags: <defaults>
</compile_context>

<pallas_src>
import jax
import jax.numpy as jnp
from jax.experimental import pallas as pl
from jax.experimental.pallas import tpu as pltpu

LANE = 128


def _round_up(x, m):
    return (x + m - 1) // m * m


def _mish(z):
    # Mish(z) = z * tanh(softplus(z)).  Using tanh(log1p(e^z)) = (w-1)/(w+1)
    # with w = (1+e^z)^2 -> one EUP exp + one approx reciprocal per element.
    zc = jnp.minimum(z, 20.0)          # for z > 20, mish(z) ~= z; keeps exp finite
    w = 1.0 + jnp.exp(zc)
    w = w * w
    return z * (w - 1.0) * pl.reciprocal(w + 1.0, approx=True)


def quantum_model_kernel(
    uc_ref,                 # (TB, 2D) f32   packed [real | imag] input rows
    wc_ref, b1_ref,         # (2D, D) bf16, (1, D) f32    folded embeddings + head[0]
    w2_ref, b2_ref,         # (D, D) bf16,  (1, D) f32    head[2]
    w3_ref, b3_ref,         # (D, 128) bf16,(1, 128) f32  head[4], lane-padded
    out_ref,                # (TB, 128) f32
):
    uc = uc_ref[...].astype(jnp.bfloat16)

    # Folded: (embeddings + concat + head[0]) in one matmul.
    h1 = jnp.dot(uc, wc_ref[...], preferred_element_type=jnp.float32) + b1_ref[...]
    h1 = _mish(h1)

    h2 = jnp.dot(h1.astype(jnp.bfloat16), w2_ref[...],
                 preferred_element_type=jnp.float32) + b2_ref[...]
    h2 = _mish(h2)

    out = jnp.dot(h2.astype(jnp.bfloat16), w3_ref[...],
                  preferred_element_type=jnp.float32) + b3_ref[...]
    out_ref[...] = out.astype(out_ref.dtype)   # lane-dense (TB, 128) store


def init_params(key, D):
    """PyTorch-Linear-style init: U(-1/sqrt(fan_in), 1/sqrt(fan_in)).
    Weights stored pre-transposed as (in_features, out_features)."""
    def linear(k, fan_in, fan_out):
        kw, kb = jax.random.split(k)
        bound = 1.0 / jnp.sqrt(fan_in)
        w = jax.random.uniform(kw, (fan_in, fan_out), jnp.float32, -bound, bound)
        b = jax.random.uniform(kb, (1, fan_out), jnp.float32, -bound, bound)
        return w, b

    k = jax.random.split(key, 5)
    wr, br = linear(k[0], D, D)          # input_real_ebd
    wi, bi = linear(k[1], D, D)          # input_imag_ebd
    w1, b1 = linear(k[2], 2 * D, D)      # head[0]
    w2, b2 = linear(k[3], D, D)          # head[2]
    w3, b3 = linear(k[4], D, 1)          # head[4]
    return (wr, br, wi, bi, w1, b1, w2, b2, w3, b3)


def prepare_params(params):
    """One-time fold of the embedding Linears into head[0] + lane padding of
    head[4]; weights cast to bf16, biases kept f32."""
    wr, br, wi, bi, w1, b1, w2, b2, w3, b3 = params
    D = wr.shape[0]
    w1_top, w1_bot = w1[:D, :], w1[D:, :]
    wc = jnp.concatenate([wr @ w1_top, wi @ w1_bot], axis=0)        # (2D, D)
    b1p = br @ w1_top + bi @ w1_bot + b1                            # (1, D)
    w3p = jnp.pad(w3, ((0, 0), (0, LANE - w3.shape[1])))            # (D, 128)
    b3p = jnp.pad(b3, ((0, 0), (0, LANE - b3.shape[1])))            # (1, 128)
    return (wc.astype(jnp.bfloat16), b1p,
            w2.astype(jnp.bfloat16), b2,
            w3p.astype(jnp.bfloat16), b3p)


def quantum_model_forward(x, u, folded_params):
    """x: unused (matches the PyTorch forward signature).  u: complex64 (B, 2**q, 2**q)."""
    del x  # forward() never uses x
    B = u.shape[0]
    D = u.shape[1] * u.shape[2]
    D2 = 2 * D

    ur = jnp.real(u).reshape(B, D).astype(jnp.float32)
    ui = jnp.imag(u).reshape(B, D).astype(jnp.float32)
    uc = jnp.concatenate([ur, ui], axis=-1)                         # (B, 2D)

    # Pad batch to >= 8 rows (sublane-full) and to a multiple of the row tile.
    TB = 256 if B > 256 else _round_up(max(B, 8), 8)
    B_pad = _round_up(B, TB)
    if B_pad != B:
        uc = jnp.pad(uc, ((0, B_pad - B), (0, 0)))

    wc, b1p, w2, b2, w3p, b3p = folded_params

    out = pl.pallas_call(
        quantum_model_kernel,
        out_shape=jax.ShapeDtypeStruct((B_pad, LANE), jnp.float32),
        grid=(B_pad // TB,),
        in_specs=[
            pl.BlockSpec((TB, D2), lambda i: (i, 0)),     # packed input rows
            pl.BlockSpec(wc.shape, lambda i: (0, 0)),     # folded W  (2D, D)
            pl.BlockSpec(b1p.shape, lambda i: (0, 0)),    # folded b1 (1, D)
            pl.BlockSpec(w2.shape, lambda i: (0, 0)),     # (D, D)
            pl.BlockSpec(b2.shape, lambda i: (0, 0)),     # (1, D)
            pl.BlockSpec(w3p.shape, lambda i: (0, 0)),    # (D, 128)
            pl.BlockSpec(b3p.shape, lambda i: (0, 0)),    # (1, 128)
        ],
        out_specs=pl.BlockSpec((TB, LANE), lambda i: (i, 0)),
        compiler_params=pltpu.CompilerParams(
            dimension_semantics=("parallel",)),           # megacore shard on v7x
    )(uc, wc, b1p, w2, b2, w3p, b3p)

    return out[:B, :1]


def _reference_forward(u, params):
    """Pure-JAX f32 reference of the original (unfolded) module."""
    wr, br, wi, bi, w1, b1, w2, b2, w3, b3 = params
    B = u.shape[0]
    D = wr.shape[0]
    ur = jnp.real(u).reshape(B, D).astype(jnp.float32)
    ui = jnp.imag(u).reshape(B, D).astype(jnp.float32)
    r_ebd = ur @ wr + br
    i_ebd = ui @ wi + bi
    cat = jnp.concatenate([r_ebd, i_ebd], axis=-1)

    def mish(z):
        return z * jnp.tanh(jax.nn.softplus(z))

    h = mish(cat @ w1 + b1)
    h = mish(h @ w2 + b2)
    return h @ w3 + b3


if __name__ == "__main__":
    num_qubits = 2
    dim = 2 ** num_qubits                 # 4
    D = dim * dim                         # param_dim = 16
    B = 4

    key = jax.random.PRNGKey(0)
    k_params, k_re, k_im, k_x = jax.random.split(key, 4)

    raw_params = init_params(k_params, D)
    folded_params = prepare_params(raw_params)

    u = (jax.random.normal(k_re, (B, dim, dim), jnp.float32)
         + 1j * jax.random.normal(k_im, (B, dim, dim), jnp.float32)).astype(jnp.complex64)
    x = jax.random.normal(k_x, (B, D), jnp.float32)   # unused by forward, kept for parity

    out = quantum_model_forward(x, u, folded_params)
    out = jax.block_until_ready(out)
    assert out.shape == (B, 1) and out.dtype == jnp.float32
    assert bool(jnp.all(jnp.isfinite(out)))

    # Sanity check against the unfolded f32 reference (bf16 dots + approx
    # reciprocal Mish -> generous tolerance).
    ref = _reference_forward(u, raw_params)
    assert jnp.allclose(out, ref, rtol=5e-2, atol=5e-2), (
        "max abs diff %s" % jnp.max(jnp.abs(out - ref)))

    print("KERNEL_OK")
</pallas_src>

<mosaic_0001>
module attributes {stable_mosaic.version = 11 : i64} {
  func.func @quantum_model_kernel(%arg0: i32, %arg1: memref<8x32xf32, #tpu.memory_space<vmem>>, %arg2: memref<32x16xbf16, #tpu.memory_space<vmem>>, %arg3: memref<1x16xf32, #tpu.memory_space<vmem>>, %arg4: memref<16x16xbf16, #tpu.memory_space<vmem>>, %arg5: memref<1x16xf32, #tpu.memory_space<vmem>>, %arg6: memref<16x128xbf16, #tpu.memory_space<vmem>>, %arg7: memref<1x128xf32, #tpu.memory_space<vmem>>, %arg8: memref<8x128xf32, #tpu.memory_space<vmem>>) attributes {dimension_semantics = [#tpu.dimension_semantics<parallel>], iteration_bounds = array<i64: 1>, scalar_prefetch = 0 : i64, scratch_operands = 0 : i64, tpu.core_type = #tpu.core_type<tc>, window_params = [{transform_indices = @transform_0, window_bounds = array<i64: 8, 32>}, {pipeline_mode = #tpu.pipeline_mode<synchronous>, transform_indices = @transform_1, window_bounds = array<i64: 32, 16>}, {pipeline_mode = #tpu.pipeline_mode<synchronous>, transform_indices = @transform_2, window_bounds = array<i64: 1, 16>}, {pipeline_mode = #tpu.pipeline_mode<synchronous>, transform_indices = @transform_3, window_bounds = array<i64: 16, 16>}, {pipeline_mode = #tpu.pipeline_mode<synchronous>, transform_indices = @transform_4, window_bounds = array<i64: 1, 16>}, {pipeline_mode = #tpu.pipeline_mode<synchronous>, transform_indices = @transform_5, window_bounds = array<i64: 16, 128>}, {pipeline_mode = #tpu.pipeline_mode<synchronous>, transform_indices = @transform_6, window_bounds = array<i64: 1, 128>}, {transform_indices = @transform_7, window_bounds = array<i64: 8, 128>}]} {
    %c0 = arith.constant 0 : index
    %c0_0 = arith.constant 0 : index
    %0 = vector.load %arg1[%c0, %c0_0] : memref<8x32xf32, #tpu.memory_space<vmem>>, vector<8x32xf32>
    %1 = arith.truncf %0 : vector<8x32xf32> to vector<8x32xbf16>
    %c0_1 = arith.constant 0 : index
    %c0_2 = arith.constant 0 : index
    %2 = vector.load %arg2[%c0_1, %c0_2] : memref<32x16xbf16, #tpu.memory_space<vmem>>, vector<32x16xbf16>
    %cst = arith.constant dense<0.000000e+00> : vector<8x16xf32>
    %3 = tpu.matmul %1, %2, %cst {dimension_numbers = #tpu.dot_dimension_numbers<[1], [0], [0], [1], [0, 0, 1, 1], [], []>} : vector<8x32xbf16>, vector<32x16xbf16>, vector<8x16xf32> -> vector<8x16xf32>
    %c0_3 = arith.constant 0 : index
    %c0_4 = arith.constant 0 : index
    %4 = vector.load %arg3[%c0_3, %c0_4] : memref<1x16xf32, #tpu.memory_space<vmem>>, vector<1x16xf32>
    %5 = vector.broadcast %4 : vector<1x16xf32> to vector<8x16xf32>
    %6 = arith.addf %3, %5 : vector<8x16xf32>
    %cst_5 = arith.constant 2.000000e+01 : f32
    %7 = vector.broadcast %cst_5 : f32 to vector<8x16xf32>
    %8 = arith.minimumf %6, %7 : vector<8x16xf32>
    %9 = math.exp %8 : vector<8x16xf32>
    %cst_6 = arith.constant 1.000000e+00 : f32
    %10 = vector.broadcast %cst_6 : f32 to vector<8x16xf32>
    %11 = arith.addf %10, %9 : vector<8x16xf32>
    %12 = arith.mulf %11, %11 : vector<8x16xf32>
    %cst_7 = arith.constant 1.000000e+00 : f32
    %13 = vector.broadcast %cst_7 : f32 to vector<8x16xf32>
    %14 = arith.subf %12, %13 : vector<8x16xf32>
    %15 = arith.mulf %6, %14 : vector<8x16xf32>
    %cst_8 = arith.constant 1.000000e+00 : f32
    %16 = vector.broadcast %cst_8 : f32 to vector<8x16xf32>
    %17 = arith.addf %12, %16 : vector<8x16xf32>
    %18 = tpu.reciprocal %17 {approx = true} : vector<8x16xf32> -> vector<8x16xf32>
    %19 = arith.mulf %15, %18 : vector<8x16xf32>
    %20 = arith.truncf %19 : vector<8x16xf32> to vector<8x16xbf16>
    %c0_9 = arith.constant 0 : index
    %c0_10 = arith.constant 0 : index
    %21 = vector.load %arg4[%c0_9, %c0_10] : memref<16x16xbf16, #tpu.memory_space<vmem>>, vector<16x16xbf16>
    %cst_11 = arith.constant dense<0.000000e+00> : vector<8x16xf32>
    %22 = tpu.matmul %20, %21, %cst_11 {dimension_numbers = #tpu.dot_dimension_numbers<[1], [0], [0], [1], [0, 0, 1, 1], [], []>} : vector<8x16xbf16>, vector<16x16xbf16>, vector<8x16xf32> -> vector<8x16xf32>
    %c0_12 = arith.constant 0 : index
    %c0_13 = arith.constant 0 : index
    %23 = vector.load %arg5[%c0_12, %c0_13] : memref<1x16xf32, #tpu.memory_space<vmem>>, vector<1x16xf32>
    %24 = vector.broadcast %23 : vector<1x16xf32> to vector<8x16xf32>
    %25 = arith.addf %22, %24 : vector<8x16xf32>
    %cst_14 = arith.constant 2.000000e+01 : f32
    %26 = vector.broadcast %cst_14 : f32 to vector<8x16xf32>
    %27 = arith.minimumf %25, %26 : vector<8x16xf32>
    %28 = math.exp %27 : vector<8x16xf32>
    %cst_15 = arith.constant 1.000000e+00 : f32
    %29 = vector.broadcast %cst_15 : f32 to vector<8x16xf32>
    %30 = arith.addf %29, %28 : vector<8x16xf32>
    %31 = arith.mulf %30, %30 : vector<8x16xf32>
    %cst_16 = arith.constant 1.000000e+00 : f32
    %32 = vector.broadcast %cst_16 : f32 to vector<8x16xf32>
    %33 = arith.subf %31, %32 : vector<8x16xf32>
    %34 = arith.mulf %25, %33 : vector<8x16xf32>
    %cst_17 = arith.constant 1.000000e+00 : f32
    %35 = vector.broadcast %cst_17 : f32 to vector<8x16xf32>
    %36 = arith.addf %31, %35 : vector<8x16xf32>
    %37 = tpu.reciprocal %36 {approx = true} : vector<8x16xf32> -> vector<8x16xf32>
    %38 = arith.mulf %34, %37 : vector<8x16xf32>
    %39 = arith.truncf %38 : vector<8x16xf32> to vector<8x16xbf16>
    %c0_18 = arith.constant 0 : index
    %c0_19 = arith.constant 0 : index
    %40 = vector.load %arg6[%c0_18, %c0_19] : memref<16x128xbf16, #tpu.memory_space<vmem>>, vector<16x128xbf16>
    %cst_20 = arith.constant dense<0.000000e+00> : vector<8x128xf32>
    %41 = tpu.matmul %39, %40, %cst_20 {dimension_numbers = #tpu.dot_dimension_numbers<[1], [0], [0], [1], [0, 0, 1, 1], [], []>} : vector<8x16xbf16>, vector<16x128xbf16>, vector<8x128xf32> -> vector<8x128xf32>
    %c0_21 = arith.constant 0 : index
    %c0_22 = arith.constant 0 : index
    %42 = vector.load %arg7[%c0_21, %c0_22] : memref<1x128xf32, #tpu.memory_space<vmem>>, vector<1x128xf32>
    %43 = vector.broadcast %42 : vector<1x128xf32> to vector<8x128xf32>
    %44 = arith.addf %41, %43 : vector<8x128xf32>
    %c0_23 = arith.constant 0 : index
    %c0_24 = arith.constant 0 : index
    %45 = vector.load %arg8[%c0_23, %c0_24] : memref<8x128xf32, #tpu.memory_space<vmem>>, vector<8x128xf32>
    tpu.vector_store %arg8[%c0_23, %c0_24], %44 {strides = array<i32>} : memref<8x128xf32, #tpu.memory_space<vmem>>, vector<8x128xf32>,
    return
  }
  func.func @transform_0(%arg0: i32) -> (i32, i32) {
    %c0_i32 = arith.constant 0 : i32
    %c0_i32_0 = arith.constant 0 : i32
    return %arg0, %c0_i32 : i32, i32
  }
  func.func @transform_1(%arg0: i32) -> (i32, i32) {
    %c0_i32 = arith.constant 0 : i32
    %c0_i32_0 = arith.constant 0 : i32
    %c0_i32_1 = arith.constant 0 : i32
    return %c0_i32, %c0_i32_0 : i32, i32
  }
  func.func @transform_2(%arg0: i32) -> (i32, i32) {
    %c0_i32 = arith.constant 0 : i32
    %c0_i32_0 = arith.constant 0 : i32
    %c0_i32_1 = arith.constant 0 : i32
    return %c0_i32, %c0_i32_0 : i32, i32
  }
  func.func @transform_3(%arg0: i32) -> (i32, i32) {
    %c0_i32 = arith.constant 0 : i32
    %c0_i32_0 = arith.constant 0 : i32
    %c0_i32_1 = arith.constant 0 : i32
    return %c0_i32, %c0_i32_0 : i32, i32
  }
  func.func @transform_4(%arg0: i32) -> (i32, i32) {
    %c0_i32 = arith.constant 0 : i32
    %c0_i32_0 = arith.constant 0 : i32
    %c0_i32_1 = arith.constant 0 : i32
    return %c0_i32, %c0_i32_0 : i32, i32
  }
  func.func @transform_5(%arg0: i32) -> (i32, i32) {
    %c0_i32 = arith.constant 0 : i32
    %c0_i32_0 = arith.constant 0 : i32
    %c0_i32_1 = arith.constant 0 : i32
    return %c0_i32, %c0_i32_0 : i32, i32
  }
  func.func @transform_6(%arg0: i32) -> (i32, i32) {
    %c0_i32 = arith.constant 0 : i32
    %c0_i32_0 = arith.constant 0 : i32
    %c0_i32_1 = arith.constant 0 : i32
    return %c0_i32, %c0_i32_0 : i32, i32
  }
  func.func @transform_7(%arg0: i32) -> (i32, i32) {
    %c0_i32 = arith.constant 0 : i32
    %c0_i32_0 = arith.constant 0 : i32
    return %arg0, %c0_i32 : i32, i32
  }
}

</mosaic_0001>

<llo_original>
// kernel: tpu_custom_call.1
$region0: #{tpu_custom_call.1}
  #allocation0 [shape = 'u32[]', space=smem, size = 0x4, offset = 0x4, fixed_abs, tag = 'smem constant byte address 0x4 - core index']
  #allocation1 [shape = 'u32[144,128]{1,0:T(1,128)}', space=vmem, size = 0x12000, scoped, tag = 'internal scratch']
  %s0 = inlined_call_operand.vmem [shape: f32[8,32], index: 0, kind: input, shape index: {}]
  %s1 = inlined_call_operand.vmem [shape: bf16[32,16], index: 1, kind: input, shape index: {}]
  %s2 = inlined_call_operand.vmem [shape: f32[1,16], index: 2, kind: input, shape index: {}]
  %s3 = inlined_call_operand.vmem [shape: bf16[16,16], index: 3, kind: input, shape index: {}]
  %s4 = inlined_call_operand.vmem [shape: f32[1,16], index: 4, kind: input, shape index: {}]
  %s5 = inlined_call_operand.vmem [shape: bf16[16,128], index: 5, kind: input, shape index: {}]
  %s6 = inlined_call_operand.vmem [shape: f32[1,128], index: 6, kind: input, shape index: {}]
  %s7 = inlined_call_operand.hbm [shape: f32[8,128], index: 7, kind: output, shape index: {}]
  %s8 = sld [smem:[#allocation0]]
  $region38: #{tpu_custom_call.1} parent=0
    _
  %s10 = ssub.s32 1, %s8
  %s11 = scalar_select 0, %s10, %s8
  $region1: #{tpu_custom_call.1} parent=0
    #allocation2 [shape = 'u8[4096]{0}', space=vmem, size = 0x1000, scoped, tag = 'output window, operand 0, single buffered']
    #allocation3 [shape = 's32[1]{0}', space=sflag, size = 0x4, scoped, tag = 'scoped memory for tpu_custom_call.1']
    %12 = vsyncpa [#allocation3], 0
    // Predicated region
    $region2: #{tpu_custom_call.1} parent=1 // pred_check
      _
    $region3: #{tpu_custom_call.1} parent=1 // pred_check_branch
      %14 = sbr.rel (0) target = $region5
    $region4: #{tpu_custom_call.1} parent=1 // pred_region
      _
    $region5: #{tpu_custom_call.1} parent=1 // pred_fallthru
      _
    // Predicated region
    $region6: #{tpu_custom_call.1} parent=1 // pred_check
      _
    $region7: #{tpu_custom_call.1} parent=1 // pred_check_branch
      %16 = sbr.rel (0) target = $region9
    $region8: #{tpu_custom_call.1} parent=1 // pred_region
      _
    $region9: #{tpu_custom_call.1} parent=1 // pred_fallthru
      _
    // Predicated region
    $region10: #{tpu_custom_call.1} parent=1 // pred_check
      _
    $region11: #{tpu_custom_call.1} parent=1 // pred_check_branch
      %18 = sbr.rel (0) target = $region13
    $region12: #{tpu_custom_call.1} parent=1 // pred_region
      _
    $region13: #{tpu_custom_call.1} parent=1 // pred_fallthru
      _
    // Predicated region
    $region14: #{tpu_custom_call.1} parent=1 // pred_check
      _
    $region15: #{tpu_custom_call.1} parent=1 // pred_check_branch
      %20 = sbr.rel (0) target = $region17
    $region16: #{tpu_custom_call.1} parent=1 // pred_region
      _
    $region17: #{tpu_custom_call.1} parent=1 // pred_fallthru
      _
    // Predicated region
    $region18: #{tpu_custom_call.1} parent=1 // pred_check
      _
    $region19: #{tpu_custom_call.1} parent=1 // pred_check_branch
      %22 = sbr.rel (0) target = $region21
    $region20: #{tpu_custom_call.1} parent=1 // pred_region
      _
    $region21: #{tpu_custom_call.1} parent=1 // pred_fallthru
      _
    // Predicated region
    $region22: #{tpu_custom_call.1} parent=1 // pred_check
      _
    $region23: #{tpu_custom_call.1} parent=1 // pred_check_branch
      %24 = sbr.rel (0) target = $region25
    $region24: #{tpu_custom_call.1} parent=1 // pred_region
      _
    $region25: #{tpu_custom_call.1} parent=1 // pred_fallthru
      _
    // Predicated region
    $region26: #{tpu_custom_call.1} parent=1 // pred_check
      _
    $region27: #{tpu_custom_call.1} parent=1 // pred_check_branch
      %26 = sbr.rel (0) target = $region29
    $region28: #{tpu_custom_call.1} parent=1 // pred_region
      _
    $region29: #{tpu_custom_call.1} parent=1 // pred_fallthru
      _
    %v28 = vld [vmem:[%s0] sm:$0xff]
    %v29 = vpack.c.bf16 %v28, %v28
    %v30 = vld [vmem:[%s1] sm:$0xf]
    %v31 = vld [vmem:[%s1 + $0x4] sm:$0xf]
    %v32 = vld [vmem:[%s1 + $0x8] sm:$0xf]
    %v33 = vld [vmem:[%s1 + $0xc] sm:$0xf]
    %v34 = vld [vmem:[%s2] sm:$0x1]
    %v36 = vlaneseq
    %v37 = vshrl.u32 %v36, 7
    %v38 = vsub.s32 0, %v37
    %v39 = vrot.slane %v34, %v38
    %v45 = vunpack.c.l.b16 %v30
    %v46 = vunpack.c.l.b16 %v31
    %v47 = vunpack.c.l.b16 %v32
    %v48 = vunpack.c.l.b16 %v33
    %v49 = vpack.c.b16 %v46, %v45
    %v50 = vpack.c.b16 %v48, %v47
    %vm53 = vcmask 261120
    %v55 = vsel %vm53, %v29, 0
    %57 = vmatprep.subr.bf16.mxu0 0
    %58 = vmatpush1.bf16.msra.mxu0 %v49
    %59 = vmatprep.subr.bf16.mxu0 0
    %60 = vmatpush1.bf16.msra.mxu0 %v50
    %61 = vmatprep.subr.bf16.mxu0 0
    %62 = vmatpush1.bf16.msra.mxu0 0
    %63 = vmatprep.subr.bf16.mxu0 0
    %64 = vmatpush1.bf16.msra.mxu0 0
    %65 = vmatprep.subr.bf16.mxu0 0
    %66 = vmatpush1.bf16.msra.mxu0 0
    %67 = vmatprep.subr.bf16.mxu0 0
    %68 = vmatpush1.bf16.msra.mxu0 0
    %69 = vmatprep.subr.bf16.mxu0 0
    %70 = vmatpush1.bf16.msra.mxu0 0
    %71 = vmatprep.subr.bf16.mxu0 0
    %72 = vmatpush1.bf16.msra.mxu0 0
    %73 = vmatprep.subr.bf16.mxu0 0
    %74 = vmatpush1.bf16.msra.mxu0 0
    %75 = vmatprep.subr.bf16.mxu0 0
    %76 = vmatpush1.bf16.msra.mxu0 0
    %77 = vmatprep.subr.bf16.mxu0 0
    %78 = vmatpush1.bf16.msra.mxu0 0
    %79 = vmatprep.subr.bf16.mxu0 0
    %80 = vmatpush1.bf16.msra.mxu0 0
    %81 = vmatprep.subr.bf16.mxu0 0
    %82 = vmatpush1.bf16.msra.mxu0 0
    %83 = vmatprep.subr.bf16.mxu0 0
    %84 = vmatpush1.bf16.msra.mxu0 0
    %85 = vmatprep.subr.bf16.mxu0 0
    %86 = vmatpush1.bf16.msra.mxu0 0
    %87 = vmatprep.subr.bf16.mxu0 0
    %88 = vmatpush1.bf16.msra.mxu0 0
    %89 = vmatprep.mubr.bf16.mxu0 0
    %90 = vmatmul.mubr.bf16.gmra.mrb[0].mxu0 %v55
    %v91 = vpop.f32.mrb[0].mxu0
    %v92 = vadd.f32 %v39, %v91
    %v93 = vpop.f32.mrb[0].mxu0
    %v94 = vpop.f32.mrb[0].mxu0
    %v95 = vpop.f32.mrb[0].mxu0
    %96 = vdwg.mxu0
    %v97 = vmin.f32 %v92, 20.0
    %v98 = vmul.f32 %v97, 1.442695
    %v99 = vpow.pop %v98
    %v100 = vadd.f32 %v99, 1.0
    %v101 = vmul.f32 %v100, %v100
    %v102 = vsub.f32 %v101, 1.0
    %v103 = vmul.f32 %v92, %v102
    %v104 = vadd.f32 %v101, 1.0
    %v105 = vrcp.pop %v104
    %v106 = vmul.f32 %v103, %v105
    %v107 = vpack.c.bf16 %v106, %v106
    %v108 = vld [vmem:[%s3] sm:$0xf]
    %v109 = vld [vmem:[%s3 + $0x4] sm:$0xf]
    %v110 = vld [vmem:[%s4] sm:$0x1]
    %v112 = vlaneseq
    %v113 = vshrl.u32 %v112, 7
    %v114 = vsub.s32 0, %v113
    %v115 = vrot.slane %v110, %v114
    %v119 = vunpack.c.l.b16 %v108
    %v120 = vunpack.c.l.b16 %v109
    %v121 = vpack.c.b16 %v120, %v119
    %vm123 = vcmask 130048
    %v125 = vsel %vm123, %v107, 0
    %127 = vmatprep.subr.bf16.mxu0 0
    %128 = vmatpush1.bf16.msra.mxu0 %v121
    %129 = vmatprep.subr.bf16.mxu0 0
    %130 = vmatpush1.bf16.msra.mxu0 0
    %131 = vmatprep.subr.bf16.mxu0 0
    %132 = vmatpush1.bf16.msra.mxu0 0
    %133 = vmatprep.subr.bf16.mxu0 0
    %134 = vmatpush1.bf16.msra.mxu0 0
    %135 = vmatprep.subr.bf16.mxu0 0
    %136 = vmatpush1.bf16.msra.mxu0 0
    %137 = vmatprep.subr.bf16.mxu0 0
    %138 = vmatpush1.bf16.msra.mxu0 0
    %139 = vmatprep.subr.bf16.mxu0 0
    %140 = vmatpush1.bf16.msra.mxu0 0
    %141 = vmatprep.subr.bf16.mxu0 0
    %142 = vmatpush1.bf16.msra.mxu0 0
    %143 = vmatprep.subr.bf16.mxu0 0
    %144 = vmatpush1.bf16.msra.mxu0 0
    %145 = vmatprep.subr.bf16.mxu0 0
    %146 = vmatpush1.bf16.msra.mxu0 0
    %147 = vmatprep.subr.bf16.mxu0 0
    %148 = vmatpush1.bf16.msra.mxu0 0
    %149 = vmatprep.subr.bf16.mxu0 0
    %150 = vmatpush1.bf16.msra.mxu0 0
    %151 = vmatprep.subr.bf16.mxu0 0
    %152 = vmatpush1.bf16.msra.mxu0 0
    %153 = vmatprep.subr.bf16.mxu0 0
    %154 = vmatpush1.bf16.msra.mxu0 0
    %155 = vmatprep.subr.bf16.mxu0 0
    %156 = vmatpush1.bf16.msra.mxu0 0
    %157 = vmatprep.subr.bf16.mxu0 0
    %158 = vmatpush1.bf16.msra.mxu0 0
    %159 = vmatprep.mubr.bf16.mxu0 0
    %160 = vmatmul.mubr.bf16.gmra.mrb[0].mxu0 %v125
    %v161 = vpop.f32.mrb[0].mxu0
    %v162 = vadd.f32 %v115, %v161
    %v163 = vpop.f32.mrb[0].mxu0
    %v164 = vpop.f32.mrb[0].mxu0
    %v165 = vpop.f32.mrb[0].mxu0
    %166 = vdwg.mxu0
    %v167 = vmin.f32 %v162, 20.0
    %v168 = vmul.f32 %v167, 1.442695
    %v169 = vpow.pop %v168
    %v170 = vadd.f32 %v169, 1.0
    %v171 = vmul.f32 %v170, %v170
    %v172 = vsub.f32 %v171, 1.0
    %v173 = vmul.f32 %v162, %v172
    %v174 = vadd.f32 %v171, 1.0
    %v175 = vrcp.pop %v174
    %v176 = vmul.f32 %v173, %v175
    %v177 = vpack.c.bf16 %v176, %v176
    %v178 = vld [vmem:[%s5] sm:$0xf]
    %v179 = vld [vmem:[%s5 + $0x4] sm:$0xf]
    %v180 = vld [vmem:[%s6] sm:$0x1]
    %v182 = vlaneseq
    %v183 = vshrl.u32 %v182, 7
    %v184 = vsub.s32 0, %v183
    %v185 = vrot.slane %v180, %v184
    %v189 = vunpack.c.l.b16 %v178
    %v190 = vunpack.c.l.b16 %v179
    %v191 = vpack.c.b16 %v190, %v189
    %v194 = vsel %vm123, %v177, 0
    %196 = vmatprep.subr.bf16.mxu0 0
    %197 = vmatpush1.bf16.msra.mxu0 %v191
    %198 = vmatprep.subr.bf16.mxu0 0
    %199 = vmatpush1.bf16.msra.mxu0 0
    %200 = vmatprep.subr.bf16.mxu0 0
    %201 = vmatpush1.bf16.msra.mxu0 0
    %202 = vmatprep.subr.bf16.mxu0 0
    %203 = vmatpush1.bf16.msra.mxu0 0
    %204 = vmatprep.subr.bf16.mxu0 0
    %205 = vmatpush1.bf16.msra.mxu0 0
    %206 = vmatprep.subr.bf16.mxu0 0
    %207 = vmatpush1.bf16.msra.mxu0 0
    %208 = vmatprep.subr.bf16.mxu0 0
    %209 = vmatpush1.bf16.msra.mxu0 0
    %210 = vmatprep.subr.bf16.mxu0 0
    %211 = vmatpush1.bf16.msra.mxu0 0
    %212 = vmatprep.subr.bf16.mxu0 0
    %213 = vmatpush1.bf16.msra.mxu0 0
    %214 = vmatprep.subr.bf16.mxu0 0
    %215 = vmatpush1.bf16.msra.mxu0 0
    %216 = vmatprep.subr.bf16.mxu0 0
    %217 = vmatpush1.bf16.msra.mxu0 0
    %218 = vmatprep.subr.bf16.mxu0 0
    %219 = vmatpush1.bf16.msra.mxu0 0
    %220 = vmatprep.subr.bf16.mxu0 0
    %221 = vmatpush1.bf16.msra.mxu0 0
    %222 = vmatprep.subr.bf16.mxu0 0
    %223 = vmatpush1.bf16.msra.mxu0 0
    %224 = vmatprep.subr.bf16.mxu0 0
    %225 = vmatpush1.bf16.msra.mxu0 0
    %226 = vmatprep.subr.bf16.mxu0 0
    %227 = vmatpush1.bf16.msra.mxu0 0
    %228 = vmatprep.mubr.bf16.mxu0 0
    %229 = vmatmul.mubr.bf16.gmra.mrb[0].mxu0 %v194
    %v230 = vpop.f32.mrb[0].mxu0
    %v231 = vadd.f32 %v185, %v230
    %v232 = vpop.f32.mrb[0].mxu0
    %v233 = vpop.f32.mrb[0].mxu0
    %v234 = vpop.f32.mrb[0].mxu0
    %235 = vdwg.mxu0
    %236 = vst [vmem:[#allocation2] sm:$0xff] %v231
    // Predicated region
    $region30: #{tpu_custom_call.1} parent=1 // pred_check
      _
    $region31: #{tpu_custom_call.1} parent=1 // pred_check_branch
      %238 = sbr.rel (0) target = $region33
    $region32: #{tpu_custom_call.1} parent=1 // pred_region
      %s240 = ssub.s32 128, 128
      %241 = vsyncadd [#allocation3], %s240
      %s243 = sshll.u32 [#allocation2], 4
      %s244 = int_to_ptr.vmem [resolvable:$true] %s243
      %246 = dma.vmem_to_hbm [thread:$0]  %s244, 128, %s7, [#allocation3]
    $region33: #{tpu_custom_call.1} parent=1 // pred_fallthru
      _
    // Predicated region
    $region34: #{tpu_custom_call.1} parent=1 // pred_check
      _
    $region35: #{tpu_custom_call.1} parent=1 // pred_check_branch
      %248 = sbr.rel (0) target = $region37
    $region36: #{tpu_custom_call.1} parent=1 // pred_region
      %249 = dma.done [#allocation3], 128
    $region37: #{tpu_custom_call.1} parent=1 // pred_fallthru
      _
    %250 = vsyncpa [#allocation3], 1

</llo_original>
